<compile_context>
chip_gen: v6e
topology: v6e:2x2x1
jax: 0.10.0
libtpu: 0.0.40
codegen_flags: <defaults>
</compile_context>

<pallas_src>
import jax
import jax.numpy as jnp
from jax.experimental import pallas as pl
from jax.experimental.pallas import tpu as pltpu

_LANE = 128
_SUBLANE = 8


def _round_up(x: int, m: int) -> int:
    return (x + m - 1) // m * m


def _vmem_capacity_bytes() -> int:
    """Physical VMEM of the running chip; conservative 64 MiB fallback (v7x)."""
    try:
        info = pltpu.get_tpu_info()
        cap = getattr(info, "vmem_capacity_bytes", None)
        if cap:
            return int(cap)
    except Exception:
        pass
    return 64 << 20


def _has_multiple_tensorcores() -> bool:
    """Heuristic: chips whose grid 'parallel' axes shard across >1 TensorCore."""
    try:
        kind = jax.devices()[0].device_kind.lower()
    except Exception:
        return False
    return any(tag in kind for tag in ("v4", "v5p", "7x", "v7"))


def _footprint_bytes(tm: int, th: int, d_model_p: int, x_isz: int, w_isz: int) -> int:
    b = 2 * tm * d_model_p * x_isz          # x tile   (double-buffered)
    b += 2 * tm * d_model_p * x_isz         # out tile (double-buffered)
    b += 2 * d_model_p * th * w_isz         # W1 chunk (double-buffered)
    b += 2 * th * d_model_p * w_isz         # W2 chunk (double-buffered)
    b += 2 * (th + d_model_p) * 4           # biases (f32)
    b += tm * th * 4                        # ReLU intermediate (f32)
    b += tm * d_model_p * 4                 # f32 accumulator / 2nd matmul result
    b += 2 << 20                            # compiler temporaries headroom
    return b


def _select_tiles(M: int, d_model_p: int, hidden_p: int,
                  x_isz: int, w_isz: int, vmem_cap: int):
    """Pick (tile_m, tile_h): maximize tile_m first (weight re-stream), then tile_h."""
    budget = min(int(vmem_cap * 0.7), vmem_cap - (8 << 20))
    budget = max(budget, 16 << 20)

    M8 = _round_up(max(M, 1), _SUBLANE)
    tm_cands = []
    for c in (512, 256, 128, 64, 32, 16, 8):
        t = min(c, M8)
        if t not in tm_cands:
            tm_cands.append(t)

    th_cands = [hidden_p]                                   # fast path first
    for c in (4096, 2048, 1024, 512, 256, 128):
        if c < hidden_p and hidden_p % c == 0:
            th_cands.append(c)

    for tm in tm_cands:
        for th in th_cands:
            if _footprint_bytes(tm, th, d_model_p, x_isz, w_isz) <= budget:
                return tm, th
    return tm_cands[-1], th_cands[-1]                       # best effort fallback


# ----------------------------------------------------------------------------
# Kernels
# ----------------------------------------------------------------------------
def _ffn_kernel_fused(x_ref, w1_ref, b1_ref, w2_ref, b2_ref, o_ref):
    # Whole hidden dim resident: no accumulator, no init/finalize.
    x = x_ref[...]
    h = jnp.dot(x, w1_ref[...], preferred_element_type=jnp.float32)
    h = jnp.maximum(h + b1_ref[...], 0.0)                   # bias + ReLU (f32)
    # dropout (eval mode) -> identity
    y = jnp.dot(h.astype(x.dtype), w2_ref[...], preferred_element_type=jnp.float32)
    o_ref[...] = (y + b2_ref[...]).astype(o_ref.dtype)


def _ffn_kernel_acc(x_ref, w1_ref, b1_ref, w2_ref, b2_ref, o_ref, acc_ref):
    # Hidden dim tiled: f32 accumulator persists over the h (reduction) axis.
    h_idx = pl.program_id(1)

    @pl.when(h_idx == 0)
    def _():
        acc_ref[...] = jnp.zeros_like(acc_ref)

    x = x_ref[...]
    h = jnp.dot(x, w1_ref[...], preferred_element_type=jnp.float32)
    h = jnp.maximum(h + b1_ref[...], 0.0)                   # bias + ReLU (f32)
    # dropout (eval mode) -> identity
    acc_ref[...] += jnp.dot(h.astype(x.dtype), w2_ref[...],
                            preferred_element_type=jnp.float32)

    @pl.when(h_idx == pl.num_programs(1) - 1)
    def _():
        o_ref[...] = (acc_ref[...] + b2_ref[...]).astype(o_ref.dtype)


# ----------------------------------------------------------------------------
# Host-side wrappers
# ----------------------------------------------------------------------------
def prepare_ffn_params(w1, b1, w2, b2):
    """Pad weights to lane-dense multiples of 128 and cast biases to f32 ONCE.

    w1: (d_model, hidden), w2: (hidden, d_model) — stored (in, out) so the
    kernel runs plain row-major matmuls on the MXU.
    """
    d_model, hidden = w1.shape
    d_model_p = _round_up(d_model, _LANE)
    hidden_p = _round_up(hidden, _LANE)
    w1p = jnp.pad(w1, ((0, d_model_p - d_model), (0, hidden_p - hidden)))
    w2p = jnp.pad(w2, ((0, hidden_p - hidden), (0, d_model_p - d_model)))
    b1p = jnp.pad(b1.astype(jnp.float32), (0, hidden_p - hidden)).reshape(1, hidden_p)
    b2p = jnp.pad(b2.astype(jnp.float32), (0, d_model_p - d_model)).reshape(1, d_model_p)
    return {"w1p": w1p, "b1p": b1p, "w2p": w2p, "b2p": b2p}


def ffn_apply(x, params, *, tile_m=None, tile_h=None, interpret=False):
    """x: (batch, seq, d_model).  params: output of prepare_ffn_params."""
    batch, seq, d_model = x.shape
    w1p, b1p, w2p, b2p = params["w1p"], params["b1p"], params["w2p"], params["b2p"]
    d_model_p, hidden_p = w1p.shape
    assert d_model <= d_model_p

    dtype = x.dtype
    M = batch * seq
    x_isz = jnp.dtype(dtype).itemsize
    w_isz = jnp.dtype(w1p.dtype).itemsize

    vmem_cap = _vmem_capacity_bytes()
    auto_tm, auto_th = _select_tiles(M, d_model_p, hidden_p, x_isz, w_isz, vmem_cap)

    if tile_m is None:
        tile_m = auto_tm
        # Ensure >= 2 row tiles on multi-TensorCore chips so the "parallel"
        # axis can shard across cores even for small-batch shapes.
        if _has_multiple_tensorcores() and M > _SUBLANE and tile_m >= M:
            tile_m = _round_up((M + 1) // 2, _SUBLANE)
    else:
        tile_m = _round_up(min(tile_m, _round_up(M, _SUBLANE)), _SUBLANE)

    if tile_h is None:
        tile_h = auto_th
    else:
        tile_h = min(_round_up(tile_h, _LANE), hidden_p)
        assert hidden_p % tile_h == 0, "explicit tile_h must divide padded hidden dim"

    M_p = _round_up(M, tile_m)
    fused = tile_h == hidden_p

    x2d = x.reshape(M, d_model)
    if M_p != M or d_model_p != d_model:
        x2d = jnp.pad(x2d, ((0, M_p - M), (0, d_model_p - d_model)))

    fp = _footprint_bytes(tile_m, tile_h, d_model_p, x_isz, w_isz)
    vmem_limit = int(min(vmem_cap, max(fp * 5 // 4 + (4 << 20), 32 << 20)))

    if fused:
        grid = (M_p // tile_m,)
        in_specs = [
            pl.BlockSpec((tile_m, d_model_p), lambda i: (i, 0)),      # x rows
            pl.BlockSpec((d_model_p, hidden_p), lambda i: (0, 0)),    # W1 (full)
            pl.BlockSpec((1, hidden_p), lambda i: (0, 0)),            # b1
            pl.BlockSpec((hidden_p, d_model_p), lambda i: (0, 0)),    # W2 (full)
            pl.BlockSpec((1, d_model_p), lambda i: (0, 0)),           # b2
        ]
        out_specs = pl.BlockSpec((tile_m, d_model_p), lambda i: (i, 0))
        scratch_shapes = ()
        kernel = _ffn_kernel_fused
        dim_sem = ("parallel",)
    else:
        grid = (M_p // tile_m, hidden_p // tile_h)
        in_specs = [
            pl.BlockSpec((tile_m, d_model_p), lambda i, h: (i, 0)),   # x rows
            pl.BlockSpec((d_model_p, tile_h), lambda i, h: (0, h)),   # W1 chunk
            pl.BlockSpec((1, tile_h), lambda i, h: (0, h)),           # b1 chunk
            pl.BlockSpec((tile_h, d_model_p), lambda i, h: (h, 0)),   # W2 chunk
            pl.BlockSpec((1, d_model_p), lambda i, h: (0, 0)),        # b2
        ]
        out_specs = pl.BlockSpec((tile_m, d_model_p), lambda i, h: (i, 0))
        scratch_shapes = (pltpu.VMEM((tile_m, d_model_p), jnp.float32),)
        kernel = _ffn_kernel_acc
        dim_sem = ("parallel", "arbitrary")

    out2d = pl.pallas_call(
        kernel,
        out_shape=jax.ShapeDtypeStruct((M_p, d_model_p), dtype),
        grid_spec=pltpu.PrefetchScalarGridSpec(
            num_scalar_prefetch=0,
            grid=grid,
            in_specs=in_specs,
            out_specs=out_specs,
            scratch_shapes=scratch_shapes,
        ),
        compiler_params=pltpu.CompilerParams(
            dimension_semantics=dim_sem,
            vmem_limit_bytes=vmem_limit,
        ),
        interpret=interpret,
    )(x2d, w1p, b1p, w2p, b2p)

    return out2d[:M, :d_model].reshape(batch, seq, d_model)


def positionwise_feed_forward(x, w1, b1, w2, b2, **kw):
    """Convenience wrapper (prepares + applies). Prefer hoisting prepare_ffn_params."""
    return ffn_apply(x, prepare_ffn_params(w1, b1, w2, b2), **kw)


def _make_params(key, d_model, hidden, dtype):
    kw1, kb1, kw2, kb2 = jax.random.split(key, 4)
    bound1 = 1.0 / (d_model ** 0.5)
    w1 = jax.random.uniform(kw1, (d_model, hidden), dtype, -bound1, bound1)
    b1 = jax.random.uniform(kb1, (hidden,), dtype, -bound1, bound1)
    bound2 = 1.0 / (hidden ** 0.5)
    w2 = jax.random.uniform(kw2, (hidden, d_model), dtype, -bound2, bound2)
    b2 = jax.random.uniform(kb2, (d_model,), dtype, -bound2, bound2)
    return w1, b1, w2, b2


if __name__ == "__main__":
    dtype = jnp.float32
    key = jax.random.PRNGKey(0)
    k1, k2, kp1, kp2 = jax.random.split(key, 4)

    # Case 1: small shapes consistent with the module (batch=2, seq=8,
    # d_model=32, d_ff=64) — exercises wrapper-side padding to 128 lanes and
    # the fused (no-accumulator) fast path.  Params padded once (hoisted).
    batch, seq, d_model, hidden = 2, 8, 32, 64
    x = jax.random.normal(k1, (batch, seq, d_model), dtype=dtype)
    w1, b1, w2, b2 = _make_params(kp1, d_model, hidden, dtype)
    params = prepare_ffn_params(w1, b1, w2, b2)          # hoisted out of the call
    ffn_jit = jax.jit(ffn_apply)
    out = jax.block_until_ready(ffn_jit(x, params))
    ref = jnp.maximum(x @ w1 + b1, 0.0) @ w2 + b2
    assert out.shape == (batch, seq, d_model)
    assert jnp.allclose(out, ref, atol=1e-5, rtol=1e-5)

    # Case 2: force multi row-tile + multi hidden-chunk path (exercises the
    # pl.when init/finalize and the f32 accumulator across the reduction axis).
    batch, seq, d_model, hidden = 2, 16, 128, 256
    x = jax.random.normal(k2, (batch, seq, d_model), dtype=dtype)
    w1, b1, w2, b2 = _make_params(kp2, d_model, hidden, dtype)
    out = jax.block_until_ready(
        positionwise_feed_forward(x, w1, b1, w2, b2, tile_m=8, tile_h=128))
    ref = jnp.maximum(x @ w1 + b1, 0.0) @ w2 + b2
    assert out.shape == (batch, seq, d_model)
    assert jnp.allclose(out, ref, atol=1e-4, rtol=1e-4)

    print("KERNEL_OK")
</pallas_src>

<mosaic_0001>
module attributes {stable_mosaic.version = 11 : i64} {
  func.func @_ffn_kernel_fused(%arg0: i32, %arg1: memref<16x128xf32, #tpu.memory_space<vmem>>, %arg2: memref<128x128xf32, #tpu.memory_space<vmem>>, %arg3: memref<1x128xf32, #tpu.memory_space<vmem>>, %arg4: memref<128x128xf32, #tpu.memory_space<vmem>>, %arg5: memref<1x128xf32, #tpu.memory_space<vmem>>, %arg6: memref<16x128xf32, #tpu.memory_space<vmem>>) attributes {dimension_semantics = [#tpu.dimension_semantics<parallel>], iteration_bounds = array<i64: 1>, scalar_prefetch = 0 : i64, scratch_operands = 0 : i64, tpu.core_type = #tpu.core_type<tc>, window_params = [{transform_indices = @transform_0, window_bounds = array<i64: 16, 128>}, {pipeline_mode = #tpu.pipeline_mode<synchronous>, transform_indices = @transform_1, window_bounds = array<i64: 128, 128>}, {pipeline_mode = #tpu.pipeline_mode<synchronous>, transform_indices = @transform_2, window_bounds = array<i64: 1, 128>}, {pipeline_mode = #tpu.pipeline_mode<synchronous>, transform_indices = @transform_3, window_bounds = array<i64: 128, 128>}, {pipeline_mode = #tpu.pipeline_mode<synchronous>, transform_indices = @transform_4, window_bounds = array<i64: 1, 128>}, {transform_indices = @transform_5, window_bounds = array<i64: 16, 128>}]} {
    %c0 = arith.constant 0 : index
    %c0_0 = arith.constant 0 : index
    %0 = vector.load %arg1[%c0, %c0_0] : memref<16x128xf32, #tpu.memory_space<vmem>>, vector<16x128xf32>
    %c0_1 = arith.constant 0 : index
    %c0_2 = arith.constant 0 : index
    %1 = vector.load %arg2[%c0_1, %c0_2] : memref<128x128xf32, #tpu.memory_space<vmem>>, vector<128x128xf32>
    %cst = arith.constant dense<0.000000e+00> : vector<16x128xf32>
    %2 = tpu.matmul %0, %1, %cst {dimension_numbers = #tpu.dot_dimension_numbers<[1], [0], [0], [1], [0, 0, 1, 1], [], []>} : vector<16x128xf32>, vector<128x128xf32>, vector<16x128xf32> -> vector<16x128xf32>
    %c0_3 = arith.constant 0 : index
    %c0_4 = arith.constant 0 : index
    %3 = vector.load %arg3[%c0_3, %c0_4] : memref<1x128xf32, #tpu.memory_space<vmem>>, vector<1x128xf32>
    %4 = vector.broadcast %3 : vector<1x128xf32> to vector<16x128xf32>
    %5 = arith.addf %2, %4 : vector<16x128xf32>
    %cst_5 = arith.constant 0.000000e+00 : f32
    %6 = vector.broadcast %cst_5 : f32 to vector<16x128xf32>
    %7 = arith.maximumf %5, %6 : vector<16x128xf32>
    %c0_6 = arith.constant 0 : index
    %c0_7 = arith.constant 0 : index
    %8 = vector.load %arg4[%c0_6, %c0_7] : memref<128x128xf32, #tpu.memory_space<vmem>>, vector<128x128xf32>
    %cst_8 = arith.constant dense<0.000000e+00> : vector<16x128xf32>
    %9 = tpu.matmul %7, %8, %cst_8 {dimension_numbers = #tpu.dot_dimension_numbers<[1], [0], [0], [1], [0, 0, 1, 1], [], []>} : vector<16x128xf32>, vector<128x128xf32>, vector<16x128xf32> -> vector<16x128xf32>
    %c0_9 = arith.constant 0 : index
    %c0_10 = arith.constant 0 : index
    %10 = vector.load %arg5[%c0_9, %c0_10] : memref<1x128xf32, #tpu.memory_space<vmem>>, vector<1x128xf32>
    %11 = vector.broadcast %10 : vector<1x128xf32> to vector<16x128xf32>
    %12 = arith.addf %9, %11 : vector<16x128xf32>
    %c0_11 = arith.constant 0 : index
    %c0_12 = arith.constant 0 : index
    %13 = vector.load %arg6[%c0_11, %c0_12] : memref<16x128xf32, #tpu.memory_space<vmem>>, vector<16x128xf32>
    tpu.vector_store %arg6[%c0_11, %c0_12], %12 {strides = array<i32>} : memref<16x128xf32, #tpu.memory_space<vmem>>, vector<16x128xf32>,
    return
  }
  func.func @transform_0(%arg0: i32) -> (i32, i32) {
    %c0_i32 = arith.constant 0 : i32
    %c0_i32_0 = arith.constant 0 : i32
    return %arg0, %c0_i32 : i32, i32
  }
  func.func @transform_1(%arg0: i32) -> (i32, i32) {
    %c0_i32 = arith.constant 0 : i32
    %c0_i32_0 = arith.constant 0 : i32
    %c0_i32_1 = arith.constant 0 : i32
    return %c0_i32, %c0_i32_0 : i32, i32
  }
  func.func @transform_2(%arg0: i32) -> (i32, i32) {
    %c0_i32 = arith.constant 0 : i32
    %c0_i32_0 = arith.constant 0 : i32
    %c0_i32_1 = arith.constant 0 : i32
    return %c0_i32, %c0_i32_0 : i32, i32
  }
  func.func @transform_3(%arg0: i32) -> (i32, i32) {
    %c0_i32 = arith.constant 0 : i32
    %c0_i32_0 = arith.constant 0 : i32
    %c0_i32_1 = arith.constant 0 : i32
    return %c0_i32, %c0_i32_0 : i32, i32
  }
  func.func @transform_4(%arg0: i32) -> (i32, i32) {
    %c0_i32 = arith.constant 0 : i32
    %c0_i32_0 = arith.constant 0 : i32
    %c0_i32_1 = arith.constant 0 : i32
    return %c0_i32, %c0_i32_0 : i32, i32
  }
  func.func @transform_5(%arg0: i32) -> (i32, i32) {
    %c0_i32 = arith.constant 0 : i32
    %c0_i32_0 = arith.constant 0 : i32
    return %arg0, %c0_i32 : i32, i32
  }
}

</mosaic_0001>

<llo_original>
// kernel: ffn_apply.1
$region0: #{ffn_apply.1}
  #allocation0 [shape = 'u32[]', space=smem, size = 0x4, offset = 0x4, fixed_abs, tag = 'smem constant byte address 0x4 - core index']
  #allocation1 [shape = 'u32[144,128]{1,0:T(1,128)}', space=vmem, size = 0x12000, scoped, tag = 'internal scratch']
  %s0 = inlined_call_operand.vmem [shape: f32[16,128], index: 0, kind: input, shape index: {}]
  %s1 = inlined_call_operand.hbm [shape: f32[128,128], index: 1, kind: input, shape index: {}]
  %s2 = inlined_call_operand.vmem [shape: f32[1,128], index: 2, kind: input, shape index: {}]
  %s3 = inlined_call_operand.hbm [shape: f32[128,128], index: 3, kind: input, shape index: {}]
  %s4 = inlined_call_operand.vmem [shape: f32[1,128], index: 4, kind: input, shape index: {}]
  %s5 = inlined_call_operand.vmem [shape: f32[16,128], index: 5, kind: output, shape index: {}]
  %s6 = sld [smem:[#allocation0]]
  $region38: #{ffn_apply.1} parent=0
    _
  %s8 = ssub.s32 1, %s6
  %s9 = scalar_select 0, %s8, %s6
  $region1: #{ffn_apply.1} parent=0
    #allocation2 [shape = 'u8[65536]{0}', space=vmem, size = 0x10000, scoped, tag = 'input window, operand 1, single buffered']
    #allocation3 [shape = 's32[1]{0}', space=sflag, size = 0x4, scoped, tag = 'scoped memory for ffn_apply.1']
    #allocation4 [shape = 'u8[65536]{0}', space=vmem, size = 0x10000, scoped, tag = 'input window, operand 3, single buffered']
    #allocation5 [shape = 's32[1]{0}', space=sflag, size = 0x4, scoped, tag = 'scoped memory for ffn_apply.1']
    %10 = vsyncpa [#allocation3], 0
    %11 = vsyncpa [#allocation5], 0
    // Predicated region
    $region2: #{ffn_apply.1} parent=1 // pred_check
      _
    $region3: #{ffn_apply.1} parent=1 // pred_check_branch
      %13 = sbr.rel (0) target = $region5
    $region4: #{ffn_apply.1} parent=1 // pred_region
      _
    $region5: #{ffn_apply.1} parent=1 // pred_fallthru
      _
    // Predicated region
    $region6: #{ffn_apply.1} parent=1 // pred_check
      _
    $region7: #{ffn_apply.1} parent=1 // pred_check_branch
      %15 = sbr.rel (0) target = $region9
    $region8: #{ffn_apply.1} parent=1 // pred_region
      %s17 = ssub.s32 2048, 2048
      %18 = vsyncadd [#allocation3], %s17
      %s19 = sshll.u32 [#allocation2], 4
      %s20 = int_to_ptr.vmem [resolvable:$true] %s19
      %25 = dma.hbm_to_vmem [thread:$0]  %s1, 2048, %s20, [#allocation3], 128, 128, 8
    $region9: #{ffn_apply.1} parent=1 // pred_fallthru
      _
    // Predicated region
    $region10: #{ffn_apply.1} parent=1 // pred_check
      _
    $region11: #{ffn_apply.1} parent=1 // pred_check_branch
      %27 = sbr.rel (0) target = $region13
    $region12: #{ffn_apply.1} parent=1 // pred_region
      _
    $region13: #{ffn_apply.1} parent=1 // pred_fallthru
      _
    // Predicated region
    $region14: #{ffn_apply.1} parent=1 // pred_check
      _
    $region15: #{ffn_apply.1} parent=1 // pred_check_branch
      %29 = sbr.rel (0) target = $region17
    $region16: #{ffn_apply.1} parent=1 // pred_region
      %s31 = ssub.s32 2048, 2048
      %32 = vsyncadd [#allocation5], %s31
      %s33 = sshll.u32 [#allocation4], 4
      %s34 = int_to_ptr.vmem [resolvable:$true] %s33
      %39 = dma.hbm_to_vmem [thread:$0]  %s3, 2048, %s34, [#allocation5], 128, 128, 8
    $region17: #{ffn_apply.1} parent=1 // pred_fallthru
      _
    // Predicated region
    $region18: #{ffn_apply.1} parent=1 // pred_check
      _
    $region19: #{ffn_apply.1} parent=1 // pred_check_branch
      %41 = sbr.rel (0) target = $region21
    $region20: #{ffn_apply.1} parent=1 // pred_region
      _
    $region21: #{ffn_apply.1} parent=1 // pred_fallthru
      _
    // Predicated region
    $region22: #{ffn_apply.1} parent=1 // pred_check
      _
    $region23: #{ffn_apply.1} parent=1 // pred_check_branch
      %43 = sbr.rel (0) target = $region25
    $region24: #{ffn_apply.1} parent=1 // pred_region
      %44 = dma.done [#allocation3], 2048
    $region25: #{ffn_apply.1} parent=1 // pred_fallthru
      _
    // Predicated region
    $region26: #{ffn_apply.1} parent=1 // pred_check
      _
    $region27: #{ffn_apply.1} parent=1 // pred_check_branch
      %46 = sbr.rel (0) target = $region29
    $region28: #{ffn_apply.1} parent=1 // pred_region
      %47 = dma.done [#allocation5], 2048
    $region29: #{ffn_apply.1} parent=1 // pred_fallthru
      _
    %v48 = vld [vmem:[%s0] sm:$0xff]
    %v49 = vld [vmem:[%s0 + $0x8] sm:$0xff]
    %v50 = vld [vmem:[#allocation2] sm:$0xff]
    %v51 = vld [vmem:[#allocation2 + $0x8] sm:$0xff]
    %v52 = vld [vmem:[#allocation2 + $0x10] sm:$0xff]
    %v53 = vld [vmem:[#allocation2 + $0x18] sm:$0xff]
    %v54 = vld [vmem:[#allocation2 + $0x20] sm:$0xff]
    %v55 = vld [vmem:[#allocation2 + $0x28] sm:$0xff]
    %v56 = vld [vmem:[#allocation2 + $0x30] sm:$0xff]
    %v57 = vld [vmem:[#allocation2 + $0x38] sm:$0xff]
    %v58 = vld [vmem:[#allocation2 + $0x40] sm:$0xff]
    %v59 = vld [vmem:[#allocation2 + $0x48] sm:$0xff]
    %v60 = vld [vmem:[#allocation2 + $0x50] sm:$0xff]
    %v61 = vld [vmem:[#allocation2 + $0x58] sm:$0xff]
    %v62 = vld [vmem:[#allocation2 + $0x60] sm:$0xff]
    %v63 = vld [vmem:[#allocation2 + $0x68] sm:$0xff]
    %v64 = vld [vmem:[#allocation2 + $0x70] sm:$0xff]
    %v65 = vld [vmem:[#allocation2 + $0x78] sm:$0xff]
    %v66 = vld [vmem:[%s2] sm:$0x1]
    %v68 = vlaneseq
    %v69 = vshrl.u32 %v68, 7
    %v70 = vsub.s32 0, %v69
    %v71 = vrot.slane %v66, %v70
    %73 = vmatprep.subr.mxu0 0.0
    %74 = vmatpush1.msra.mxu0 %v65
    %75 = vmatprep.subr.mxu0 0.0
    %76 = vmatpush1.msra.mxu0 %v64
    %77 = vmatprep.subr.mxu0 0.0
    %78 = vmatpush1.msra.mxu0 %v63
    %79 = vmatprep.subr.mxu0 0.0
    %80 = vmatpush1.msra.mxu0 %v62
    %81 = vmatprep.subr.mxu0 0.0
    %82 = vmatpush1.msra.mxu0 %v61
    %83 = vmatprep.subr.mxu0 0.0
    %84 = vmatpush1.msra.mxu0 %v60
    %85 = vmatprep.subr.mxu0 0.0
    %86 = vmatpush1.msra.mxu0 %v59
    %87 = vmatprep.subr.mxu0 0.0
    %88 = vmatpush1.msra.mxu0 %v58
    %89 = vmatprep.subr.mxu0 0.0
    %90 = vmatpush1.msra.mxu0 %v57
    %91 = vmatprep.subr.mxu0 0.0
    %92 = vmatpush1.msra.mxu0 %v56
    %93 = vmatprep.subr.mxu0 0.0
    %94 = vmatpush1.msra.mxu0 %v55
    %95 = vmatprep.subr.mxu0 0.0
    %96 = vmatpush1.msra.mxu0 %v54
    %97 = vmatprep.subr.mxu0 0.0
    %98 = vmatpush1.msra.mxu0 %v53
    %99 = vmatprep.subr.mxu0 0.0
    %100 = vmatpush1.msra.mxu0 %v52
    %101 = vmatprep.subr.mxu0 0.0
    %102 = vmatpush1.msra.mxu0 %v51
    %103 = vmatprep.subr.mxu0 0.0
    %104 = vmatpush1.msra.mxu0 %v50
    %105 = vmatprep.subr.mxu0 0.0
    %106 = vmatpush2.msra.mxu0 0.0
    %107 = vmatprep.subr.mxu0 0.0
    %108 = vmatpush2.msra.mxu0 0.0
    %109 = vmatprep.subr.mxu0 0.0
    %110 = vmatpush2.msra.mxu0 0.0
    %111 = vmatprep.subr.mxu0 0.0
    %112 = vmatpush2.msra.mxu0 0.0
    %113 = vmatprep.subr.mxu0 0.0
    %114 = vmatpush2.msra.mxu0 0.0
    %115 = vmatprep.subr.mxu0 0.0
    %116 = vmatpush2.msra.mxu0 0.0
    %117 = vmatprep.subr.mxu0 0.0
    %118 = vmatpush2.msra.mxu0 0.0
    %119 = vmatprep.subr.mxu0 0.0
    %120 = vmatpush2.msra.mxu0 0.0
    %121 = vmatprep.subr.mxu0 0.0
    %122 = vmatpush2.msra.mxu0 0.0
    %123 = vmatprep.subr.mxu0 0.0
    %124 = vmatpush2.msra.mxu0 0.0
    %125 = vmatprep.subr.mxu0 0.0
    %126 = vmatpush2.msra.mxu0 0.0
    %127 = vmatprep.subr.mxu0 0.0
    %128 = vmatpush2.msra.mxu0 0.0
    %129 = vmatprep.subr.mxu0 0.0
    %130 = vmatpush2.msra.mxu0 0.0
    %131 = vmatprep.subr.mxu0 0.0
    %132 = vmatpush2.msra.mxu0 0.0
    %133 = vmatprep.subr.mxu0 0.0
    %134 = vmatpush2.msra.mxu0 0.0
    %135 = vmatprep.subr.mxu0 0.0
    %136 = vmatpush2.msra.mxu0 0.0
    %137 = vmatprep.mubr.f32.mxu0 0.0
    %138 = vmatmul.mubr.f32.gmra.mxu0 %v48
    %v139 = vpop.f32.mrf.mxu0
    %v140 = vadd.f32 %v71, %v139
    %v141 = vpop.f32.mrf.mxu0
    %142 = vmatprep.mubr.f32.mxu0 0.0
    %143 = vmatmul.mubr.f32.gmra.mxu0 %v49
    %v144 = vpop.f32.mrf.mxu0
    %v145 = vadd.f32 %v71, %v144
    %v146 = vpop.f32.mrf.mxu0
    %147 = vdwg.mxu0
    %v148 = vmax.f32 %v140, 0.0
    %v149 = vmax.f32 %v145, 0.0
    %v150 = vld [vmem:[#allocation4] sm:$0xff]
    %v151 = vld [vmem:[#allocation4 + $0x8] sm:$0xff]
    %v152 = vld [vmem:[#allocation4 + $0x10] sm:$0xff]
    %v153 = vld [vmem:[#allocation4 + $0x18] sm:$0xff]
    %v154 = vld [vmem:[#allocation4 + $0x20] sm:$0xff]
    %v155 = vld [vmem:[#allocation4 + $0x28] sm:$0xff]
    %v156 = vld [vmem:[#allocation4 + $0x30] sm:$0xff]
    %v157 = vld [vmem:[#allocation4 + $0x38] sm:$0xff]
    %v158 = vld [vmem:[#allocation4 + $0x40] sm:$0xff]
    %v159 = vld [vmem:[#allocation4 + $0x48] sm:$0xff]
    %v160 = vld [vmem:[#allocation4 + $0x50] sm:$0xff]
    %v161 = vld [vmem:[#allocation4 + $0x58] sm:$0xff]
    %v162 = vld [vmem:[#allocation4 + $0x60] sm:$0xff]
    %v163 = vld [vmem:[#allocation4 + $0x68] sm:$0xff]
    %v164 = vld [vmem:[#allocation4 + $0x70] sm:$0xff]
    %v165 = vld [vmem:[#allocation4 + $0x78] sm:$0xff]
    %v166 = vld [vmem:[%s4] sm:$0x1]
    %v168 = vlaneseq
    %v169 = vshrl.u32 %v168, 7
    %v170 = vsub.s32 0, %v169
    %v171 = vrot.slane %v166, %v170
    %173 = vmatprep.subr.mxu0 0.0
    %174 = vmatpush1.msra.mxu0 %v165
    %175 = vmatprep.subr.mxu0 0.0
    %176 = vmatpush1.msra.mxu0 %v164
    %177 = vmatprep.subr.mxu0 0.0
    %178 = vmatpush1.msra.mxu0 %v163
    %179 = vmatprep.subr.mxu0 0.0
    %180 = vmatpush1.msra.mxu0 %v162
    %181 = vmatprep.subr.mxu0 0.0
    %182 = vmatpush1.msra.mxu0 %v161
    %183 = vmatprep.subr.mxu0 0.0
    %184 = vmatpush1.msra.mxu0 %v160
    %185 = vmatprep.subr.mxu0 0.0
    %186 = vmatpush1.msra.mxu0 %v159
    %187 = vmatprep.subr.mxu0 0.0
    %188 = vmatpush1.msra.mxu0 %v158
    %189 = vmatprep.subr.mxu0 0.0
    %190 = vmatpush1.msra.mxu0 %v157
    %191 = vmatprep.subr.mxu0 0.0
    %192 = vmatpush1.msra.mxu0 %v156
    %193 = vmatprep.subr.mxu0 0.0
    %194 = vmatpush1.msra.mxu0 %v155
    %195 = vmatprep.subr.mxu0 0.0
    %196 = vmatpush1.msra.mxu0 %v154
    %197 = vmatprep.subr.mxu0 0.0
    %198 = vmatpush1.msra.mxu0 %v153
    %199 = vmatprep.subr.mxu0 0.0
    %200 = vmatpush1.msra.mxu0 %v152
    %201 = vmatprep.subr.mxu0 0.0
    %202 = vmatpush1.msra.mxu0 %v151
    %203 = vmatprep.subr.mxu0 0.0
    %204 = vmatpush1.msra.mxu0 %v150
    %205 = vmatprep.subr.mxu0 0.0
    %206 = vmatpush2.msra.mxu0 0.0
    %207 = vmatprep.subr.mxu0 0.0
    %208 = vmatpush2.msra.mxu0 0.0
    %209 = vmatprep.subr.mxu0 0.0
    %210 = vmatpush2.msra.mxu0 0.0
    %211 = vmatprep.subr.mxu0 0.0
    %212 = vmatpush2.msra.mxu0 0.0
    %213 = vmatprep.subr.mxu0 0.0
    %214 = vmatpush2.msra.mxu0 0.0
    %215 = vmatprep.subr.mxu0 0.0
    %216 = vmatpush2.msra.mxu0 0.0
    %217 = vmatprep.subr.mxu0 0.0
    %218 = vmatpush2.msra.mxu0 0.0
    %219 = vmatprep.subr.mxu0 0.0
    %220 = vmatpush2.msra.mxu0 0.0
    %221 = vmatprep.subr.mxu0 0.0
    %222 = vmatpush2.msra.mxu0 0.0
    %223 = vmatprep.subr.mxu0 0.0
    %224 = vmatpush2.msra.mxu0 0.0
    %225 = vmatprep.subr.mxu0 0.0
    %226 = vmatpush2.msra.mxu0 0.0
    %227 = vmatprep.subr.mxu0 0.0
    %228 = vmatpush2.msra.mxu0 0.0
    %229 = vmatprep.subr.mxu0 0.0
    %230 = vmatpush2.msra.mxu0 0.0
    %231 = vmatprep.subr.mxu0 0.0
    %232 = vmatpush2.msra.mxu0 0.0
    %233 = vmatprep.subr.mxu0 0.0
    %234 = vmatpush2.msra.mxu0 0.0
    %235 = vmatprep.subr.mxu0 0.0
    %236 = vmatpush2.msra.mxu0 0.0
    %237 = vmatprep.mubr.f32.mxu0 0.0
    %238 = vmatmul.mubr.f32.gmra.mxu0 %v148
    %v239 = vpop.f32.mrf.mxu0
    %v240 = vadd.f32 %v171, %v239
    %v241 = vpop.f32.mrf.mxu0
    %242 = vmatprep.mubr.f32.mxu0 0.0
    %243 = vmatmul.mubr.f32.gmra.mxu0 %v149
    %v244 = vpop.f32.mrf.mxu0
    %v245 = vadd.f32 %v171, %v244
    %v246 = vpop.f32.mrf.mxu0
    %247 = vdwg.mxu0
    %248 = vst [vmem:[%s5] sm:$0xff] %v240
    %249 = vst [vmem:[%s5 + $0x8] sm:$0xff] %v245
    // Predicated region
    $region30: #{ffn_apply.1} parent=1 // pred_check
      _
    $region31: #{ffn_apply.1} parent=1 // pred_check_branch
      %251 = sbr.rel (0) target = $region33
    $region32: #{ffn_apply.1} parent=1 // pred_region
      _
    $region33: #{ffn_apply.1} parent=1 // pred_fallthru
      _
    // Predicated region
    $region34: #{ffn_apply.1} parent=1 // pred_check
      _
    $region35: #{ffn_apply.1} parent=1 // pred_check_branch
      %253 = sbr.rel (0) target = $region37
    $region36: #{ffn_apply.1} parent=1 // pred_region
      _
    $region37: #{ffn_apply.1} parent=1 // pred_fallthru
      _
    %254 = vsyncpa [#allocation3], 1
    %255 = vsyncpa [#allocation5], 1

</llo_original>
